<compile_context>
chip_gen: v6e
topology: v6e:2x2x1
jax: 0.10.0
libtpu: 0.0.40
codegen_flags: <defaults>
</compile_context>

<pallas_src>
import jax
import jax.numpy as jnp
from jax.experimental import pallas as pl
from jax.experimental.pallas import tpu as pltpu


# ----------------------------------------------------------------------------
# Glue: mirror of PipelineStageModule._partition_evenly / _partition
# ----------------------------------------------------------------------------
def partition_evenly(layers, num_stages):
    nlayers = len(layers)
    chunk_size = nlayers // num_stages
    assert chunk_size > 0, "num_stages must be smaller than the number of layers"
    stage_idx = 0
    rst = {}
    for i, layer in enumerate(layers):
        if i > 0 and i % chunk_size == 0 and (i // chunk_size < num_stages):
            stage_idx += 1
        rst[id(layer)] = stage_idx
    assert stage_idx == num_stages - 1
    return rst


def partition(layers, num_stages, stage_index, partition_fn=None):
    if partition_fn is not None:
        mapping = partition_fn(layers, num_stages)
    else:
        mapping = partition_evenly(layers, num_stages)
    # TODO(synk): weight-sharing bookkeeping (_gather_pp_stage_idxs_for_weight_sharing,
    # mark_weight_sharing) is metadata-only (no compute) and is not reproduced as kernel work.
    return [layer for layer in layers if mapping[id(layer)] == stage_index]


# ----------------------------------------------------------------------------
# Pallas kernel: fused two-layer affine stage forward (one batch tile per step)
# ----------------------------------------------------------------------------
def stage_kernel(x_ref, w1_ref, b1_ref, w2_ref, b2_ref, o_ref):
    # Cast activations to bf16 in-kernel: the VPU slot has slack while the MXU
    # runs, so this is effectively free and avoids a wrapper cast pass over x.
    x = x_ref[...].astype(jnp.bfloat16)
    # First linear: bf16 operands on the MXU, f32 accumulate.
    h = jnp.dot(x, w1_ref[...], preferred_element_type=jnp.float32)
    # Bias add / epilogue in f32 (v5e has no bf16 VPU; cast once at the end).
    h = h + b1_ref[...]
    # Second linear: feed hidden activations back to the MXU in bf16.
    o = jnp.dot(h.astype(w2_ref.dtype), w2_ref[...],
                preferred_element_type=jnp.float32)
    o = o + b2_ref[...]
    o_ref[...] = o.astype(o_ref.dtype)   # single cast on the final store


# ----------------------------------------------------------------------------
# Helpers
# ----------------------------------------------------------------------------
def _round_up(x, m):
    return ((x + m - 1) // m) * m


def _vmem_budget_bytes():
    """Generation-aware VMEM budget: ~3/4 of per-core VMEM.
    v5e/v6e (128 MiB) -> 96 MiB, v7x (64 MiB) -> 48 MiB.
    Falls back to the v7x-safe 48 MiB if the query is unavailable."""
    try:
        cap = getattr(pltpu.get_tpu_info(), "vmem_capacity_bytes", None)
    except Exception:
        cap = None
    if not cap:
        cap = 64 * 1024 * 1024
    return int(cap) * 3 // 4


def _pick_tile_m(b128, d_in_p, d_h_p, d_out_p, x_bytes, o_bytes,
                 budget_bytes, weight_buffers):
    """Largest batch tile whose working set fits the VMEM budget.

    Accounts for: weights/biases (x weight_buffers), double-buffered x/out
    tiles, and the in-kernel temporaries (bf16 x copy, f32+bf16 hidden,
    f32 pre-cast output)."""
    weights = weight_buffers * (2 * (d_in_p * d_h_p + d_h_p * d_out_p)   # bf16 weights
                                + 4 * (d_h_p + d_out_p))                 # f32 biases
    for tm in (4096, 2048, 1024, 512, 256, 128):
        if tm > b128:
            continue
        acts = 2 * tm * (d_in_p * x_bytes + d_out_p * o_bytes)           # 2-buffer I/O
        interm = tm * (d_in_p * 2 + d_h_p * (4 + 2) + d_out_p * 4)       # kernel temps
        if weights + acts + interm <= budget_bytes:
            return tm
    return 128


def _const_spec(shape, single_buffer):
    """Constant index_map -> block stays VMEM-resident across grid steps.
    single_buffer drops the useless second pipeline buffer (halves weight
    VMEM, most valuable on v7x's 64 MiB per-core VMEM)."""
    index_map = lambda i: (0, 0)
    if single_buffer:
        return pl.BlockSpec(shape, index_map, pipeline_mode=pl.Buffered(1))
    return pl.BlockSpec(shape, index_map)


# ----------------------------------------------------------------------------
# Stage construction: one-time weight prep + jitted forward
# ----------------------------------------------------------------------------
def make_stage_forward(stage_layers, *, out_dtype=None, single_buffer_weights=True):
    """Build the fused forward for this pipeline stage.

    Weight padding + bf16 casting happens ONCE here (stage construction), so
    the steady-state forward only streams activations.
    """
    assert len(stage_layers) == 2, "demo stage expects exactly two Linear layers"
    (w1, b1), (w2, b2) = [(p["weight"], p["bias"]) for _, p in stage_layers]
    D_in, D_h, D_out = int(w1.shape[1]), int(w1.shape[0]), int(w2.shape[0])
    assert int(w2.shape[1]) == D_h

    # Lane-dense zero padding (exact for affine layers).  128 is the layout
    # requirement; real tk/tn tiles in a future K/N-tiled variant should be
    # 256/512 multiples for v6e/v7x's 2x256^2 MXUs.
    D_in_p, D_h_p, D_out_p = (_round_up(d, 128) for d in (D_in, D_h, D_out))

    # PyTorch Linear weight is [out, in]; the kernel consumes [in, out] (W^T).
    w1_p = jnp.zeros((D_in_p, D_h_p), jnp.bfloat16).at[:D_in, :D_h].set(
        w1.T.astype(jnp.bfloat16))
    w2_p = jnp.zeros((D_h_p, D_out_p), jnp.bfloat16).at[:D_h, :D_out].set(
        w2.T.astype(jnp.bfloat16))
    b1_p = jnp.zeros((1, D_h_p), jnp.float32).at[0, :D_h].set(b1.astype(jnp.float32))
    b2_p = jnp.zeros((1, D_out_p), jnp.float32).at[0, :D_out].set(b2.astype(jnp.float32))

    budget = _vmem_budget_bytes()
    weight_buffers = 1 if single_buffer_weights else 2

    # TODO(synk): if bit-exact f32 Linear numerics are required, add an f32
    # (3-pass bf16 split) matmul path instead of single-pass bf16 operands.

    @jax.jit
    def forward(x):
        B, d_in = x.shape
        assert d_in == D_in, f"expected input dim {D_in}, got {d_in}"
        o_dtype = jnp.dtype(out_dtype) if out_dtype is not None else x.dtype
        x_bytes = x.dtype.itemsize
        o_bytes = o_dtype.itemsize

        B128 = _round_up(B, 128)
        TM = _pick_tile_m(B128, D_in_p, D_h_p, D_out_p, x_bytes, o_bytes,
                          budget, weight_buffers)
        B_p = _round_up(B, TM)
        # Guarantee >=2 grid steps when the batch allows, so the "parallel"
        # batch axis can occupy both of v7x's TensorCores.  Costs at most one
        # extra ~0.35us step on single-core chips.
        while B_p // TM < 2 and TM > 128:
            TM //= 2
            B_p = _round_up(B, TM)

        # Pad x only if needed; no wrapper bf16 cast pass (done in-kernel).
        if (B_p, D_in_p) != (B, D_in):
            x_p = jnp.zeros((B_p, D_in_p), x.dtype).at[:B, :D_in].set(x)
        else:
            x_p = x

        grid = (B_p // TM,)
        cost = pl.CostEstimate(
            flops=2 * B_p * (D_in_p * D_h_p + D_h_p * D_out_p),
            transcendentals=0,
            bytes_accessed=(x_p.size * x_bytes + w1_p.size * 2 + w2_p.size * 2
                            + b1_p.size * 4 + b2_p.size * 4
                            + B_p * D_out_p * o_bytes),
        )

        # TODO(synk): once D_in_p*D_h_p (bf16) exceeds ~1/3 of the VMEM budget
        # (reached ~2x earlier on v7x), add a "parallel" N axis over D_out and a
        # trailing "arbitrary" K axis over D_in with an f32 VMEM accumulator and
        # pl.when init/finalize, using 256/512-multiple tk/tn on v6e/v7x.

        out_p = pl.pallas_call(
            stage_kernel,
            out_shape=jax.ShapeDtypeStruct((B_p, D_out_p), o_dtype),
            grid=grid,
            in_specs=[
                # Activations: tiled over batch -> pipelined against MXU work.
                pl.BlockSpec((TM, D_in_p), lambda i: (i, 0)),
                # Weights / biases: constant index_map -> VMEM-resident.
                _const_spec((D_in_p, D_h_p), single_buffer_weights),
                _const_spec((1, D_h_p), single_buffer_weights),
                _const_spec((D_h_p, D_out_p), single_buffer_weights),
                _const_spec((1, D_out_p), single_buffer_weights),
            ],
            out_specs=pl.BlockSpec((TM, D_out_p), lambda i: (i, 0)),
            compiler_params=pltpu.CompilerParams(
                # Batch tiles are independent -> megacore sharding on v7x.
                dimension_semantics=("parallel",),
                vmem_limit_bytes=budget,
            ),
            cost_estimate=cost,
        )(x_p, w1_p, b1_p, w2_p, b2_p)

        if (B_p, D_out_p) != (B, D_out):
            out_p = out_p[:B, :D_out]
        return out_p

    return forward


# ----------------------------------------------------------------------------
# Deterministic parameter construction (PyTorch-style Linear shapes: [out, in])
# ----------------------------------------------------------------------------
def make_linear_params(key, in_features, out_features):
    kw, kb = jax.random.split(key)
    bound = 1.0 / jnp.sqrt(in_features)
    w = jax.random.uniform(kw, (out_features, in_features), jnp.float32, -bound, bound)
    b = jax.random.uniform(kb, (out_features,), jnp.float32, -bound, bound)
    return {"weight": w, "bias": b}


if __name__ == "__main__":
    key = jax.random.PRNGKey(0)
    k0, k1, k2, k3, kx = jax.random.split(key, 5)

    # Linearized toy model (all Linear layers):
    #   Linear(32, 64) -> Linear(64, 64) -> Linear(64, 32) -> Linear(32, 32)
    layer_params = [
        make_linear_params(k0, 32, 64),
        make_linear_params(k1, 64, 64),
        make_linear_params(k2, 64, 32),
        make_linear_params(k3, 32, 32),
    ]
    layers = [("linear", p) for p in layer_params]

    num_stages = 2
    stage_index = 0  # this pipeline stage owns layers[0] and layers[1]
    stage_modules = partition(layers, num_stages, stage_index)
    assert len(stage_modules) == 2

    # Input to this stage: [batch, in_features]
    x = jax.random.normal(kx, (8, 32), jnp.float32)

    # Build (pads/casts weights once) and run.  If this jax build rejects
    # single-buffered constant blocks on the main pipeline, fall back to the
    # default double-buffered weight specs.
    try:
        stage_forward = make_stage_forward(stage_modules, single_buffer_weights=True)
        out = jax.block_until_ready(stage_forward(x))
    except Exception:
        stage_forward = make_stage_forward(stage_modules, single_buffer_weights=False)
        out = jax.block_until_ready(stage_forward(x))

    # Reference: sequential application of the stage's Linear layers (exactly
    # what PipelineStageModule.forward does), with the same bf16-operand /
    # f32-accumulate numerics as the kernel.
    ref = x
    for _, p in stage_modules:
        ref = jnp.dot(ref.astype(jnp.bfloat16), p["weight"].T.astype(jnp.bfloat16),
                      preferred_element_type=jnp.float32) + p["bias"]

    assert out.shape == ref.shape == (8, 64)
    assert jnp.allclose(out, ref, atol=1e-3, rtol=1e-3), "mismatch vs reference"
    print("KERNEL_OK")
</pallas_src>

<mosaic_0001>
module attributes {stable_mosaic.version = 11 : i64} {
  func.func @stage_kernel(%arg0: i32, %arg1: memref<128x128xf32, #tpu.memory_space<vmem>>, %arg2: memref<128x128xbf16, #tpu.memory_space<vmem>>, %arg3: memref<1x128xf32, #tpu.memory_space<vmem>>, %arg4: memref<128x128xbf16, #tpu.memory_space<vmem>>, %arg5: memref<1x128xf32, #tpu.memory_space<vmem>>, %arg6: memref<128x128xf32, #tpu.memory_space<vmem>>) attributes {dimension_semantics = [#tpu.dimension_semantics<parallel>], iteration_bounds = array<i64: 1>, scalar_prefetch = 0 : i64, scratch_operands = 0 : i64, tpu.core_type = #tpu.core_type<tc>, window_params = [{transform_indices = @transform_0, window_bounds = array<i64: 128, 128>}, {pipeline_mode = #tpu.pipeline_mode<synchronous>, transform_indices = @transform_1, window_bounds = array<i64: 128, 128>}, {pipeline_mode = #tpu.pipeline_mode<synchronous>, transform_indices = @transform_2, window_bounds = array<i64: 1, 128>}, {pipeline_mode = #tpu.pipeline_mode<synchronous>, transform_indices = @transform_3, window_bounds = array<i64: 128, 128>}, {pipeline_mode = #tpu.pipeline_mode<synchronous>, transform_indices = @transform_4, window_bounds = array<i64: 1, 128>}, {transform_indices = @transform_5, window_bounds = array<i64: 128, 128>}]} {
    %c0 = arith.constant 0 : index
    %c0_0 = arith.constant 0 : index
    %0 = vector.load %arg1[%c0, %c0_0] : memref<128x128xf32, #tpu.memory_space<vmem>>, vector<128x128xf32>
    %1 = arith.truncf %0 : vector<128x128xf32> to vector<128x128xbf16>
    %c0_1 = arith.constant 0 : index
    %c0_2 = arith.constant 0 : index
    %2 = vector.load %arg2[%c0_1, %c0_2] : memref<128x128xbf16, #tpu.memory_space<vmem>>, vector<128x128xbf16>
    %cst = arith.constant dense<0.000000e+00> : vector<128x128xf32>
    %3 = tpu.matmul %1, %2, %cst {dimension_numbers = #tpu.dot_dimension_numbers<[1], [0], [0], [1], [0, 0, 1, 1], [], []>} : vector<128x128xbf16>, vector<128x128xbf16>, vector<128x128xf32> -> vector<128x128xf32>
    %c0_3 = arith.constant 0 : index
    %c0_4 = arith.constant 0 : index
    %4 = vector.load %arg3[%c0_3, %c0_4] : memref<1x128xf32, #tpu.memory_space<vmem>>, vector<1x128xf32>
    %5 = vector.broadcast %4 : vector<1x128xf32> to vector<128x128xf32>
    %6 = arith.addf %3, %5 : vector<128x128xf32>
    %7 = arith.truncf %6 : vector<128x128xf32> to vector<128x128xbf16>
    %c0_5 = arith.constant 0 : index
    %c0_6 = arith.constant 0 : index
    %8 = vector.load %arg4[%c0_5, %c0_6] : memref<128x128xbf16, #tpu.memory_space<vmem>>, vector<128x128xbf16>
    %cst_7 = arith.constant dense<0.000000e+00> : vector<128x128xf32>
    %9 = tpu.matmul %7, %8, %cst_7 {dimension_numbers = #tpu.dot_dimension_numbers<[1], [0], [0], [1], [0, 0, 1, 1], [], []>} : vector<128x128xbf16>, vector<128x128xbf16>, vector<128x128xf32> -> vector<128x128xf32>
    %c0_8 = arith.constant 0 : index
    %c0_9 = arith.constant 0 : index
    %10 = vector.load %arg5[%c0_8, %c0_9] : memref<1x128xf32, #tpu.memory_space<vmem>>, vector<1x128xf32>
    %11 = vector.broadcast %10 : vector<1x128xf32> to vector<128x128xf32>
    %12 = arith.addf %9, %11 : vector<128x128xf32>
    %c0_10 = arith.constant 0 : index
    %c0_11 = arith.constant 0 : index
    %13 = vector.load %arg6[%c0_10, %c0_11] : memref<128x128xf32, #tpu.memory_space<vmem>>, vector<128x128xf32>
    tpu.vector_store %arg6[%c0_10, %c0_11], %12 {strides = array<i32>} : memref<128x128xf32, #tpu.memory_space<vmem>>, vector<128x128xf32>,
    return
  }
  func.func @transform_0(%arg0: i32) -> (i32, i32) {
    %c0_i32 = arith.constant 0 : i32
    %c0_i32_0 = arith.constant 0 : i32
    return %arg0, %c0_i32 : i32, i32
  }
  func.func @transform_1(%arg0: i32) -> (i32, i32) {
    %c0_i32 = arith.constant 0 : i32
    %c0_i32_0 = arith.constant 0 : i32
    %c0_i32_1 = arith.constant 0 : i32
    return %c0_i32, %c0_i32_0 : i32, i32
  }
  func.func @transform_2(%arg0: i32) -> (i32, i32) {
    %c0_i32 = arith.constant 0 : i32
    %c0_i32_0 = arith.constant 0 : i32
    %c0_i32_1 = arith.constant 0 : i32
    return %c0_i32, %c0_i32_0 : i32, i32
  }
  func.func @transform_3(%arg0: i32) -> (i32, i32) {
    %c0_i32 = arith.constant 0 : i32
    %c0_i32_0 = arith.constant 0 : i32
    %c0_i32_1 = arith.constant 0 : i32
    return %c0_i32, %c0_i32_0 : i32, i32
  }
  func.func @transform_4(%arg0: i32) -> (i32, i32) {
    %c0_i32 = arith.constant 0 : i32
    %c0_i32_0 = arith.constant 0 : i32
    %c0_i32_1 = arith.constant 0 : i32
    return %c0_i32, %c0_i32_0 : i32, i32
  }
  func.func @transform_5(%arg0: i32) -> (i32, i32) {
    %c0_i32 = arith.constant 0 : i32
    %c0_i32_0 = arith.constant 0 : i32
    return %arg0, %c0_i32 : i32, i32
  }
}

module attributes {stable_mosaic.version = 11 : i64} {
  func.func @stage_kernel(%arg0: i32, %arg1: memref<128x128xf32, #tpu.memory_space<vmem>>, %arg2: memref<128x128xbf16, #tpu.memory_space<vmem>>, %arg3: memref<1x128xf32, #tpu.memory_space<vmem>>, %arg4: memref<128x128xbf16, #tpu.memory_space<vmem>>, %arg5: memref<1x128xf32, #tpu.memory_space<vmem>>, %arg6: memref<128x128xf32, #tpu.memory_space<vmem>>) attributes {dimension_semantics = [#tpu.dimension_semantics<parallel>], iteration_bounds = array<i64: 1>, scalar_prefetch = 0 : i64, scratch_operands = 0 : i64, tpu.core_type = #tpu.core_type<tc>, window_params = [{transform_indices = @transform_0, window_bounds = array<i64: 128, 128>}, {pipeline_mode = #tpu.pipeline_mode<synchronous>, transform_indices = @transform_1, window_bounds = array<i64: 128, 128>}, {pipeline_mode = #tpu.pipeline_mode<synchronous>, transform_indices = @transform_2, window_bounds = array<i64: 1, 128>}, {pipeline_mode = #tpu.pipeline_mode<synchronous>, transform_indices = @transform_3, window_bounds = array<i64: 128, 128>}, {pipeline_mode = #tpu.pipeline_mode<synchronous>, transform_indices = @transform_4, window_bounds = array<i64: 1, 128>}, {transform_indices = @transform_5, window_bounds = array<i64: 128, 128>}]} {
    %c0 = arith.constant 0 : index
    %c0_0 = arith.constant 0 : index
    %0 = vector.load %arg1[%c0, %c0_0] : memref<128x128xf32, #tpu.memory_space<vmem>>, vector<128x128xf32>
    %1 = arith.truncf %0 : vector<128x128xf32> to vector<128x128xbf16>
    %c0_1 = arith.constant 0 : index
    %c0_2 = arith.constant 0 : index
    %2 = vector.load %arg2[%c0_1, %c0_2] : memref<128x128xbf16, #tpu.memory_space<vmem>>, vector<128x128xbf16>
    %cst = arith.constant dense<0.000000e+00> : vector<128x128xf32>
    %3 = tpu.matmul %1, %2, %cst {dimension_numbers = #tpu.dot_dimension_numbers<[1], [0], [0], [1], [0, 0, 1, 1], [], []>} : vector<128x128xbf16>, vector<128x128xbf16>, vector<128x128xf32> -> vector<128x128xf32>
    %c0_3 = arith.constant 0 : index
    %c0_4 = arith.constant 0 : index
    %4 = vector.load %arg3[%c0_3, %c0_4] : memref<1x128xf32, #tpu.memory_space<vmem>>, vector<1x128xf32>
    %5 = vector.broadcast %4 : vector<1x128xf32> to vector<128x128xf32>
    %6 = arith.addf %3, %5 : vector<128x128xf32>
    %7 = arith.truncf %6 : vector<128x128xf32> to vector<128x128xbf16>
    %c0_5 = arith.constant 0 : index
    %c0_6 = arith.constant 0 : index
    %8 = vector.load %arg4[%c0_5, %c0_6] : memref<128x128xbf16, #tpu.memory_space<vmem>>, vector<128x128xbf16>
    %cst_7 = arith.constant dense<0.000000e+00> : vector<128x128xf32>
    %9 = tpu.matmul %7, %8, %cst_7 {dimension_numbers = #tpu.dot_dimension_numbers<[1], [0], [0], [1], [0, 0, 1, 1], [], []>} : vector<128x128xbf16>, vector<128x128xbf16>, vector<128x128xf32> -> vector<128x128xf32>
    %c0_8 = arith.constant 0 : index
    %c0_9 = arith.constant 0 : index
    %10 = vector.load %arg5[%c0_8, %c0_9] : memref<1x128xf32, #tpu.memory_space<vmem>>, vector<1x128xf32>
    %11 = vector.broadcast %10 : vector<1x128xf32> to vector<128x128xf32>
    %12 = arith.addf %9, %11 : vector<128x128xf32>
    %c0_10 = arith.constant 0 : index
    %c0_11 = arith.constant 0 : index
    %13 = vector.load %arg6[%c0_10, %c0_11] : memref<128x128xf32, #tpu.memory_space<vmem>>, vector<128x128xf32>
    tpu.vector_store %arg6[%c0_10, %c0_11], %12 {strides = array<i32>} : memref<128x128xf32, #tpu.memory_space<vmem>>, vector<128x128xf32>,
    return
  }
  func.func @transform_0(%arg0: i32) -> (i32, i32) {
    %c0_i32 = arith.constant 0 : i32
    %c0_i32_0 = arith.constant 0 : i32
    return %arg0, %c0_i32 : i32, i32
  }
  func.func @transform_1(%arg0: i32) -> (i32, i32) {
    %c0_i32 = arith.constant 0 : i32
    %c0_i32_0 = arith.constant 0 : i32
    %c0_i32_1 = arith.constant 0 : i32
    return %c0_i32, %c0_i32_0 : i32, i32
  }
  func.func @transform_2(%arg0: i32) -> (i32, i32) {
    %c0_i32 = arith.constant 0 : i32
    %c0_i32_0 = arith.constant 0 : i32
    %c0_i32_1 = arith.constant 0 : i32
    return %c0_i32, %c0_i32_0 : i32, i32
  }
  func.func @transform_3(%arg0: i32) -> (i32, i32) {
    %c0_i32 = arith.constant 0 : i32
    %c0_i32_0 = arith.constant 0 : i32
    %c0_i32_1 = arith.constant 0 : i32
    return %c0_i32, %c0_i32_0 : i32, i32
  }
  func.func @transform_4(%arg0: i32) -> (i32, i32) {
    %c0_i32 = arith.constant 0 : i32
    %c0_i32_0 = arith.constant 0 : i32
    %c0_i32_1 = arith.constant 0 : i32
    return %c0_i32, %c0_i32_0 : i32, i32
  }
  func.func @transform_5(%arg0: i32) -> (i32, i32) {
    %c0_i32 = arith.constant 0 : i32
    %c0_i32_0 = arith.constant 0 : i32
    return %arg0, %c0_i32 : i32, i32
  }
}

</mosaic_0001>

<llo_original>
// kernel: forward.1
$region0: #{forward.1}
  #allocation0 [shape = 'u32[]', space=smem, size = 0x4, offset = 0x4, fixed_abs, tag = 'smem constant byte address 0x4 - core index']
  #allocation1 [shape = 'u32[144,128]{1,0:T(1,128)}', space=vmem, size = 0x12000, scoped, tag = 'internal scratch']
  %s0 = inlined_call_operand.vmem [shape: f32[128,128], index: 0, kind: input, shape index: {}]
  %s1 = inlined_call_operand.vmem [shape: bf16[128,128], index: 1, kind: input, shape index: {}]
  %s2 = inlined_call_operand.vmem [shape: f32[1,128], index: 2, kind: input, shape index: {}]
  %s3 = inlined_call_operand.vmem [shape: bf16[128,128], index: 3, kind: input, shape index: {}]
  %s4 = inlined_call_operand.vmem [shape: f32[1,128], index: 4, kind: input, shape index: {}]
  %s5 = inlined_call_operand.vmem [shape: f32[128,128], index: 5, kind: output, shape index: {}]
  %s6 = sld [smem:[#allocation0]]
  $region30: #{forward.1} parent=0
    _
  %s8 = ssub.s32 1, %s6
  %s9 = scalar_select 0, %s8, %s6
  // Predicated region
  $region2: #{forward.1} parent=0 // pred_check
    _
  $region3: #{forward.1} parent=0 // pred_check_branch
    %11 = sbr.rel (0) target = $region5
  $region4: #{forward.1} parent=0 // pred_region
    _
  $region5: #{forward.1} parent=0 // pred_fallthru
    _
  // Predicated region
  $region6: #{forward.1} parent=0 // pred_check
    _
  $region7: #{forward.1} parent=0 // pred_check_branch
    %13 = sbr.rel (0) target = $region9
  $region8: #{forward.1} parent=0 // pred_region
    _
  $region9: #{forward.1} parent=0 // pred_fallthru
    _
  // Predicated region
  $region10: #{forward.1} parent=0 // pred_check
    _
  $region11: #{forward.1} parent=0 // pred_check_branch
    %15 = sbr.rel (0) target = $region13
  $region12: #{forward.1} parent=0 // pred_region
    _
  $region13: #{forward.1} parent=0 // pred_fallthru
    _
  // Predicated region
  $region14: #{forward.1} parent=0 // pred_check
    _
  $region15: #{forward.1} parent=0 // pred_check_branch
    %17 = sbr.rel (0) target = $region17
  $region16: #{forward.1} parent=0 // pred_region
    _
  $region17: #{forward.1} parent=0 // pred_fallthru
    _
  // Predicated region
  $region18: #{forward.1} parent=0 // pred_check
    _
  $region19: #{forward.1} parent=0 // pred_check_branch
    %19 = sbr.rel (0) target = $region21
  $region20: #{forward.1} parent=0 // pred_region
    _
  $region21: #{forward.1} parent=0 // pred_fallthru
    _
  %v21 = vld [vmem:[%s0] sm:$0xff]
  %v22 = vld [vmem:[%s0 + $0x8] sm:$0xff]
  %v23 = vld [vmem:[%s0 + $0x10] sm:$0xff]
  %v24 = vld [vmem:[%s0 + $0x18] sm:$0xff]
  %v25 = vld [vmem:[%s0 + $0x20] sm:$0xff]
  %v26 = vld [vmem:[%s0 + $0x28] sm:$0xff]
  %v27 = vld [vmem:[%s0 + $0x30] sm:$0xff]
  %v28 = vld [vmem:[%s0 + $0x38] sm:$0xff]
  %v29 = vld [vmem:[%s0 + $0x40] sm:$0xff]
  %v30 = vld [vmem:[%s0 + $0x48] sm:$0xff]
  %v31 = vld [vmem:[%s0 + $0x50] sm:$0xff]
  %v32 = vld [vmem:[%s0 + $0x58] sm:$0xff]
  %v33 = vld [vmem:[%s0 + $0x60] sm:$0xff]
  %v34 = vld [vmem:[%s0 + $0x68] sm:$0xff]
  %v35 = vld [vmem:[%s0 + $0x70] sm:$0xff]
  %v36 = vld [vmem:[%s0 + $0x78] sm:$0xff]
  %v37 = vpack.c.bf16 %v22, %v21
  %v38 = vpack.c.bf16 %v24, %v23
  %v39 = vpack.c.bf16 %v26, %v25
  %v40 = vpack.c.bf16 %v28, %v27
  %v41 = vpack.c.bf16 %v30, %v29
  %v42 = vpack.c.bf16 %v32, %v31
  %v43 = vpack.c.bf16 %v34, %v33
  %v44 = vpack.c.bf16 %v36, %v35
  %v45 = vld [vmem:[%s1] sm:$0xf]
  %v46 = vld [vmem:[%s1 + $0x4] sm:$0xf]
  %v47 = vld [vmem:[%s1 + $0x8] sm:$0xf]
  %v48 = vld [vmem:[%s1 + $0xc] sm:$0xf]
  %v49 = vld [vmem:[%s1 + $0x10] sm:$0xf]
  %v50 = vld [vmem:[%s1 + $0x14] sm:$0xf]
  %v51 = vld [vmem:[%s1 + $0x18] sm:$0xf]
  %v52 = vld [vmem:[%s1 + $0x1c] sm:$0xf]
  %v53 = vld [vmem:[%s1 + $0x20] sm:$0xf]
  %v54 = vld [vmem:[%s1 + $0x24] sm:$0xf]
  %v55 = vld [vmem:[%s1 + $0x28] sm:$0xf]
  %v56 = vld [vmem:[%s1 + $0x2c] sm:$0xf]
  %v57 = vld [vmem:[%s1 + $0x30] sm:$0xf]
  %v58 = vld [vmem:[%s1 + $0x34] sm:$0xf]
  %v59 = vld [vmem:[%s1 + $0x38] sm:$0xf]
  %v60 = vld [vmem:[%s1 + $0x3c] sm:$0xf]
  %v61 = vld [vmem:[%s2] sm:$0x1]
  %v63 = vlaneseq
  %v64 = vshrl.u32 %v63, 7
  %v65 = vsub.s32 0, %v64
  %v66 = vrot.slane %v61, %v65
  %v84 = vunpack.c.l.b16 %v45
  %v85 = vunpack.c.l.b16 %v46
  %v86 = vunpack.c.l.b16 %v47
  %v87 = vunpack.c.l.b16 %v48
  %v88 = vunpack.c.l.b16 %v49
  %v89 = vunpack.c.l.b16 %v50
  %v90 = vunpack.c.l.b16 %v51
  %v91 = vunpack.c.l.b16 %v52
  %v92 = vunpack.c.l.b16 %v53
  %v93 = vunpack.c.l.b16 %v54
  %v94 = vunpack.c.l.b16 %v55
  %v95 = vunpack.c.l.b16 %v56
  %v96 = vunpack.c.l.b16 %v57
  %v97 = vunpack.c.l.b16 %v58
  %v98 = vunpack.c.l.b16 %v59
  %v99 = vunpack.c.l.b16 %v60
  %v100 = vpack.c.b16 %v85, %v84
  %v101 = vpack.c.b16 %v87, %v86
  %v102 = vpack.c.b16 %v89, %v88
  %v103 = vpack.c.b16 %v91, %v90
  %v104 = vpack.c.b16 %v93, %v92
  %v105 = vpack.c.b16 %v95, %v94
  %v106 = vpack.c.b16 %v97, %v96
  %v107 = vpack.c.b16 %v99, %v98
  %116 = vmatprep.subr.bf16.mxu0 0
  %117 = vmatpush1.bf16.msra.mxu0 %v107
  %118 = vmatprep.subr.bf16.mxu0 0
  %119 = vmatpush1.bf16.msra.mxu0 %v106
  %120 = vmatprep.subr.bf16.mxu0 0
  %121 = vmatpush1.bf16.msra.mxu0 %v105
  %122 = vmatprep.subr.bf16.mxu0 0
  %123 = vmatpush1.bf16.msra.mxu0 %v104
  %124 = vmatprep.subr.bf16.mxu0 0
  %125 = vmatpush1.bf16.msra.mxu0 %v103
  %126 = vmatprep.subr.bf16.mxu0 0
  %127 = vmatpush1.bf16.msra.mxu0 %v102
  %128 = vmatprep.subr.bf16.mxu0 0
  %129 = vmatpush1.bf16.msra.mxu0 %v101
  %130 = vmatprep.subr.bf16.mxu0 0
  %131 = vmatpush1.bf16.msra.mxu0 %v100
  %132 = vmatprep.subr.bf16.mxu0 0
  %133 = vmatpush2.bf16.msra.mxu0 0
  %134 = vmatprep.subr.bf16.mxu0 0
  %135 = vmatpush2.bf16.msra.mxu0 0
  %136 = vmatprep.subr.bf16.mxu0 0
  %137 = vmatpush2.bf16.msra.mxu0 0
  %138 = vmatprep.subr.bf16.mxu0 0
  %139 = vmatpush2.bf16.msra.mxu0 0
  %140 = vmatprep.subr.bf16.mxu0 0
  %141 = vmatpush2.bf16.msra.mxu0 0
  %142 = vmatprep.subr.bf16.mxu0 0
  %143 = vmatpush2.bf16.msra.mxu0 0
  %144 = vmatprep.subr.bf16.mxu0 0
  %145 = vmatpush2.bf16.msra.mxu0 0
  %146 = vmatprep.subr.bf16.mxu0 0
  %147 = vmatpush2.bf16.msra.mxu0 0
  %148 = vmatprep.mubr.bf16.mxu0 0
  %149 = vmatmul.mubr.bf16.gmra.mxu0 %v37
  %v150 = vpop.f32.mrf.mxu0
  %v151 = vadd.f32 %v66, %v150
  %v152 = vpop.f32.mrf.mxu0
  %v153 = vpop.f32.mrf.mxu0
  %v154 = vadd.f32 %v66, %v153
  %v155 = vpop.f32.mrf.mxu0
  %156 = vmatprep.mubr.bf16.mxu0 0
  %157 = vmatmul.mubr.bf16.gmra.mxu0 %v38
  %v158 = vpop.f32.mrf.mxu0
  %v159 = vadd.f32 %v66, %v158
  %v160 = vpop.f32.mrf.mxu0
  %v161 = vpop.f32.mrf.mxu0
  %v162 = vadd.f32 %v66, %v161
  %v163 = vpop.f32.mrf.mxu0
  %164 = vmatprep.mubr.bf16.mxu0 0
  %165 = vmatmul.mubr.bf16.gmra.mxu0 %v39
  %v166 = vpop.f32.mrf.mxu0
  %v167 = vadd.f32 %v66, %v166
  %v168 = vpop.f32.mrf.mxu0
  %v169 = vpop.f32.mrf.mxu0
  %v170 = vadd.f32 %v66, %v169
  %v171 = vpop.f32.mrf.mxu0
  %172 = vmatprep.mubr.bf16.mxu0 0
  %173 = vmatmul.mubr.bf16.gmra.mxu0 %v40
  %v174 = vpop.f32.mrf.mxu0
  %v175 = vadd.f32 %v66, %v174
  %v176 = vpop.f32.mrf.mxu0
  %v177 = vpop.f32.mrf.mxu0
  %v178 = vadd.f32 %v66, %v177
  %v179 = vpop.f32.mrf.mxu0
  %180 = vmatprep.mubr.bf16.mxu0 0
  %181 = vmatmul.mubr.bf16.gmra.mxu0 %v41
  %v182 = vpop.f32.mrf.mxu0
  %v183 = vadd.f32 %v66, %v182
  %v184 = vpop.f32.mrf.mxu0
  %v185 = vpop.f32.mrf.mxu0
  %v186 = vadd.f32 %v66, %v185
  %v187 = vpop.f32.mrf.mxu0
  %188 = vmatprep.mubr.bf16.mxu0 0
  %189 = vmatmul.mubr.bf16.gmra.mxu0 %v42
  %v190 = vpop.f32.mrf.mxu0
  %v191 = vadd.f32 %v66, %v190
  %v192 = vpop.f32.mrf.mxu0
  %v193 = vpop.f32.mrf.mxu0
  %v194 = vadd.f32 %v66, %v193
  %v195 = vpop.f32.mrf.mxu0
  %196 = vmatprep.mubr.bf16.mxu0 0
  %197 = vmatmul.mubr.bf16.gmra.mxu0 %v43
  %v198 = vpop.f32.mrf.mxu0
  %v199 = vadd.f32 %v66, %v198
  %v200 = vpop.f32.mrf.mxu0
  %v201 = vpop.f32.mrf.mxu0
  %v202 = vadd.f32 %v66, %v201
  %v203 = vpop.f32.mrf.mxu0
  %204 = vmatprep.mubr.bf16.mxu0 0
  %205 = vmatmul.mubr.bf16.gmra.mxu0 %v44
  %v206 = vpop.f32.mrf.mxu0
  %v207 = vadd.f32 %v66, %v206
  %v208 = vpop.f32.mrf.mxu0
  %v209 = vpop.f32.mrf.mxu0
  %v210 = vadd.f32 %v66, %v209
  %v211 = vpop.f32.mrf.mxu0
  %212 = vdwg.mxu0
  %v213 = vpack.c.bf16 %v154, %v151
  %v214 = vpack.c.bf16 %v162, %v159
  %v215 = vpack.c.bf16 %v170, %v167
  %v216 = vpack.c.bf16 %v178, %v175
  %v217 = vpack.c.bf16 %v186, %v183
  %v218 = vpack.c.bf16 %v194, %v191
  %v219 = vpack.c.bf16 %v202, %v199
  %v220 = vpack.c.bf16 %v210, %v207
  %v221 = vld [vmem:[%s3] sm:$0xf]
  %v222 = vld [vmem:[%s3 + $0x4] sm:$0xf]
  %v223 = vld [vmem:[%s3 + $0x8] sm:$0xf]
  %v224 = vld [vmem:[%s3 + $0xc] sm:$0xf]
  %v225 = vld [vmem:[%s3 + $0x10] sm:$0xf]
  %v226 = vld [vmem:[%s3 + $0x14] sm:$0xf]
  %v227 = vld [vmem:[%s3 + $0x18] sm:$0xf]
  %v228 = vld [vmem:[%s3 + $0x1c] sm:$0xf]
  %v229 = vld [vmem:[%s3 + $0x20] sm:$0xf]
  %v230 = vld [vmem:[%s3 + $0x24] sm:$0xf]
  %v231 = vld [vmem:[%s3 + $0x28] sm:$0xf]
  %v232 = vld [vmem:[%s3 + $0x2c] sm:$0xf]
  %v233 = vld [vmem:[%s3 + $0x30] sm:$0xf]
  %v234 = vld [vmem:[%s3 + $0x34] sm:$0xf]
  %v235 = vld [vmem:[%s3 + $0x38] sm:$0xf]
  %v236 = vld [vmem:[%s3 + $0x3c] sm:$0xf]
  %v237 = vld [vmem:[%s4] sm:$0x1]
  %v239 = vlaneseq
  %v240 = vshrl.u32 %v239, 7
  %v241 = vsub.s32 0, %v240
  %v242 = vrot.slane %v237, %v241
  %v260 = vunpack.c.l.b16 %v221
  %v261 = vunpack.c.l.b16 %v222
  %v262 = vunpack.c.l.b16 %v223
  %v263 = vunpack.c.l.b16 %v224
  %v264 = vunpack.c.l.b16 %v225
  %v265 = vunpack.c.l.b16 %v226
  %v266 = vunpack.c.l.b16 %v227
  %v267 = vunpack.c.l.b16 %v228
  %v268 = vunpack.c.l.b16 %v229
  %v269 = vunpack.c.l.b16 %v230
  %v270 = vunpack.c.l.b16 %v231
  %v271 = vunpack.c.l.b16 %v232
  %v272 = vunpack.c.l.b16 %v233
  %v273 = vunpack.c.l.b16 %v234
  %v274 = vunpack.c.l.b16 %v235
  %v275 = vunpack.c.l.b16 %v236
  %v276 = vpack.c.b16 %v261, %v260
  %v277 = vpack.c.b16 %v263, %v262
  %v278 = vpack.c.b16 %v265, %v264
  %v279 = vpack.c.b16 %v267, %v266
  %v280 = vpack.c.b16 %v269, %v268
  %v281 = vpack.c.b16 %v271, %v270
  %v282 = vpack.c.b16 %v273, %v272
  %v283 = vpack.c.b16 %v275, %v274
  %292 = vmatprep.subr.bf16.mxu0 0
  %293 = vmatpush1.bf16.msra.mxu0 %v283
  %294 = vmatprep.subr.bf16.mxu0 0
  %295 = vmatpush1.bf16.msra.mxu0 %v282
  %296 = vmatprep.subr.bf16.mxu0 0
  %297 = vmatpush1.bf16.msra.mxu0 %v281
  %298 = vmatprep.subr.bf16.mxu0 0
  %299 = vmatpush1.bf16.msra.mxu0 %v280
  %300 = vmatprep.subr.bf16.mxu0 0
  %301 = vmatpush1.bf16.msra.mxu0 %v279
  %302 = vmatprep.subr.bf16.mxu0 0
  %303 = vmatpush1.bf16.msra.mxu0 %v278
  %304 = vmatprep.subr.bf16.mxu0 0
  %305 = vmatpush1.bf16.msra.mxu0 %v277
  %306 = vmatprep.subr.bf16.mxu0 0
  %307 = vmatpush1.bf16.msra.mxu0 %v276
  %308 = vmatprep.subr.bf16.mxu0 0
  %309 = vmatpush2.bf16.msra.mxu0 0
  %310 = vmatprep.subr.bf16.mxu0 0
  %311 = vmatpush2.bf16.msra.mxu0 0
  %312 = vmatprep.subr.bf16.mxu0 0
  %313 = vmatpush2.bf16.msra.mxu0 0
  %314 = vmatprep.subr.bf16.mxu0 0
  %315 = vmatpush2.bf16.msra.mxu0 0
  %316 = vmatprep.subr.bf16.mxu0 0
  %317 = vmatpush2.bf16.msra.mxu0 0
  %318 = vmatprep.subr.bf16.mxu0 0
  %319 = vmatpush2.bf16.msra.mxu0 0
  %320 = vmatprep.subr.bf16.mxu0 0
  %321 = vmatpush2.bf16.msra.mxu0 0
  %322 = vmatprep.subr.bf16.mxu0 0
  %323 = vmatpush2.bf16.msra.mxu0 0
  %324 = vmatprep.mubr.bf16.mxu0 0
  %325 = vmatmul.mubr.bf16.gmra.mxu0 %v213
  %v326 = vpop.f32.mrf.mxu0
  %v327 = vadd.f32 %v242, %v326
  %v328 = vpop.f32.mrf.mxu0
  %v329 = vpop.f32.mrf.mxu0
  %v330 = vadd.f32 %v242, %v329
  %v331 = vpop.f32.mrf.mxu0
  %332 = vmatprep.mubr.bf16.mxu0 0
  %333 = vmatmul.mubr.bf16.gmra.mxu0 %v214
  %v334 = vpop.f32.mrf.mxu0
  %v335 = vadd.f32 %v242, %v334
  %v336 = vpop.f32.mrf.mxu0
  %v337 = vpop.f32.mrf.mxu0
  %v338 = vadd.f32 %v242, %v337
  %v339 = vpop.f32.mrf.mxu0
  %340 = vmatprep.mubr.bf16.mxu0 0
  %341 = vmatmul.mubr.bf16.gmra.mxu0 %v215
  %v342 = vpop.f32.mrf.mxu0
  %v343 = vadd.f32 %v242, %v342
  %v344 = vpop.f32.mrf.mxu0
  %v345 = vpop.f32.mrf.mxu0
  %v346 = vadd.f32 %v242, %v345
  %v347 = vpop.f32.mrf.mxu0
  %348 = vmatprep.mubr.bf16.mxu0 0
  %349 = vmatmul.mubr.bf16.gmra.mxu0 %v216
  %v350 = vpop.f32.mrf.mxu0
  %v351 = vadd.f32 %v242, %v350
  %v352 = vpop.f32.mrf.mxu0
  %v353 = vpop.f32.mrf.mxu0
  %v354 = vadd.f32 %v242, %v353
  %v355 = vpop.f32.mrf.mxu0
  %356 = vmatprep.mubr.bf16.mxu0 0
  %357 = vmatmul.mubr.bf16.gmra.mxu0 %v217
  %v358 = vpop.f32.mrf.mxu0
  %v359 = vadd.f32 %v242, %v358
  %v360 = vpop.f32.mrf.mxu0
  %v361 = vpop.f32.mrf.mxu0
  %v362 = vadd.f32 %v242, %v361
  %v363 = vpop.f32.mrf.mxu0
  %364 = vmatprep.mubr.bf16.mxu0 0
  %365 = vmatmul.mubr.bf16.gmra.mxu0 %v218
  %v366 = vpop.f32.mrf.mxu0
  %v367 = vadd.f32 %v242, %v366
  %v368 = vpop.f32.mrf.mxu0
  %v369 = vpop.f32.mrf.mxu0
  %v370 = vadd.f32 %v242, %v369
  %v371 = vpop.f32.mrf.mxu0
  %372 = vmatprep.mubr.bf16.mxu0 0
  %373 = vmatmul.mubr.bf16.gmra.mxu0 %v219
  %v374 = vpop.f32.mrf.mxu0
  %v375 = vadd.f32 %v242, %v374
  %v376 = vpop.f32.mrf.mxu0
  %v377 = vpop.f32.mrf.mxu0
  %v378 = vadd.f32 %v242, %v377
  %v379 = vpop.f32.mrf.mxu0
  %380 = vmatprep.mubr.bf16.mxu0 0
  %381 = vmatmul.mubr.bf16.gmra.mxu0 %v220
  %v382 = vpop.f32.mrf.mxu0
  %v383 = vadd.f32 %v242, %v382
  %v384 = vpop.f32.mrf.mxu0
  %v385 = vpop.f32.mrf.mxu0
  %v386 = vadd.f32 %v242, %v385
  %v387 = vpop.f32.mrf.mxu0
  %388 = vdwg.mxu0
  %389 = vst [vmem:[%s5] sm:$0xff] %v327
  %390 = vst [vmem:[%s5 + $0x8] sm:$0xff] %v330
  %391 = vst [vmem:[%s5 + $0x10] sm:$0xff] %v335
  %392 = vst [vmem:[%s5 + $0x18] sm:$0xff] %v338
  %393 = vst [vmem:[%s5 + $0x20] sm:$0xff] %v343
  %394 = vst [vmem:[%s5 + $0x28] sm:$0xff] %v346
  %395 = vst [vmem:[%s5 + $0x30] sm:$0xff] %v351
  %396 = vst [vmem:[%s5 + $0x38] sm:$0xff] %v354
  %397 = vst [vmem:[%s5 + $0x40] sm:$0xff] %v359
  %398 = vst [vmem:[%s5 + $0x48] sm:$0xff] %v362
  %399 = vst [vmem:[%s5 + $0x50] sm:$0xff] %v367
  %400 = vst [vmem:[%s5 + $0x58] sm:$0xff] %v370
  %401 = vst [vmem:[%s5 + $0x60] sm:$0xff] %v375
  %402 = vst [vmem:[%s5 + $0x68] sm:$0xff] %v378
  %403 = vst [vmem:[%s5 + $0x70] sm:$0xff] %v383
  %404 = vst [vmem:[%s5 + $0x78] sm:$0xff] %v386
  // Predicated region
  $region22: #{forward.1} parent=0 // pred_check
    _
  $region23: #{forward.1} parent=0 // pred_check_branch
    %406 = sbr.rel (0) target = $region25
  $region24: #{forward.1} parent=0 // pred_region
    _
  $region25: #{forward.1} parent=0 // pred_fallthru
    _
  // Predicated region
  $region26: #{forward.1} parent=0 // pred_check
    _
  $region27: #{forward.1} parent=0 // pred_check_branch
    %408 = sbr.rel (0) target = $region29
  $region28: #{forward.1} parent=0 // pred_region
    _
  $region29: #{forward.1} parent=0 // pred_fallthru
    _

// kernel: forward.1
$region0: #{forward.1}
  #allocation0 [shape = 'u32[]', space=smem, size = 0x4, offset = 0x4, fixed_abs, tag = 'smem constant byte address 0x4 - core index']
  #allocation1 [shape = 'u32[144,128]{1,0:T(1,128)}', space=vmem, size = 0x12000, scoped, tag = 'internal scratch']
  %s0 = inlined_call_operand.vmem [shape: f32[128,128], index: 0, kind: input, shape index: {}]
  %s1 = inlined_call_operand.vmem [shape: bf16[128,128], index: 1, kind: input, shape index: {}]
  %s2 = inlined_call_operand.vmem [shape: f32[1,128], index: 2, kind: input, shape index: {}]
  %s3 = inlined_call_operand.vmem [shape: bf16[128,128], index: 3, kind: input, shape index: {}]
  %s4 = inlined_call_operand.vmem [shape: f32[1,128], index: 4, kind: input, shape index: {}]
  %s5 = inlined_call_operand.vmem [shape: f32[128,128], index: 5, kind: output, shape index: {}]
  %s6 = sld [smem:[#allocation0]]
  $region30: #{forward.1} parent=0
    _
  %s8 = ssub.s32 1, %s6
  %s9 = scalar_select 0, %s8, %s6
  // Predicated region
  $region2: #{forward.1} parent=0 // pred_check
    _
  $region3: #{forward.1} parent=0 // pred_check_branch
    %11 = sbr.rel (0) target = $region5
  $region4: #{forward.1} parent=0 // pred_region
    _
  $region5: #{forward.1} parent=0 // pred_fallthru
    _
  // Predicated region
  $region6: #{forward.1} parent=0 // pred_check
    _
  $region7: #{forward.1} parent=0 // pred_check_branch
    %13 = sbr.rel (0) target = $region9
  $region8: #{forward.1} parent=0 // pred_region
    _
  $region9: #{forward.1} parent=0 // pred_fallthru
    _
  // Predicated region
  $region10: #{forward.1} parent=0 // pred_check
    _
  $region11: #{forward.1} parent=0 // pred_check_branch
    %15 = sbr.rel (0) target = $region13
  $region12: #{forward.1} parent=0 // pred_region
    _
  $region13: #{forward.1} parent=0 // pred_fallthru
    _
  // Predicated region
  $region14: #{forward.1} parent=0 // pred_check
    _
  $region15: #{forward.1} parent=0 // pred_check_branch
    %17 = sbr.rel (0) target = $region17
  $region16: #{forward.1} parent=0 // pred_region
    _
  $region17: #{forward.1} parent=0 // pred_fallthru
    _
  // Predicated region
  $region18: #{forward.1} parent=0 // pred_check
    _
  $region19: #{forward.1} parent=0 // pred_check_branch
    %19 = sbr.rel (0) target = $region21
  $region20: #{forward.1} parent=0 // pred_region
    _
  $region21: #{forward.1} parent=0 // pred_fallthru
    _
  %v21 = vld [vmem:[%s0] sm:$0xff]
  %v22 = vld [vmem:[%s0 + $0x8] sm:$0xff]
  %v23 = vld [vmem:[%s0 + $0x10] sm:$0xff]
  %v24 = vld [vmem:[%s0 + $0x18] sm:$0xff]
  %v25 = vld [vmem:[%s0 + $0x20] sm:$0xff]
  %v26 = vld [vmem:[%s0 + $0x28] sm:$0xff]
  %v27 = vld [vmem:[%s0 + $0x30] sm:$0xff]
  %v28 = vld [vmem:[%s0 + $0x38] sm:$0xff]
  %v29 = vld [vmem:[%s0 + $0x40] sm:$0xff]
  %v30 = vld [vmem:[%s0 + $0x48] sm:$0xff]
  %v31 = vld [vmem:[%s0 + $0x50] sm:$0xff]
  %v32 = vld [vmem:[%s0 + $0x58] sm:$0xff]
  %v33 = vld [vmem:[%s0 + $0x60] sm:$0xff]
  %v34 = vld [vmem:[%s0 + $0x68] sm:$0xff]
  %v35 = vld [vmem:[%s0 + $0x70] sm:$0xff]
  %v36 = vld [vmem:[%s0 + $0x78] sm:$0xff]
  %v37 = vpack.c.bf16 %v22, %v21
  %v38 = vpack.c.bf16 %v24, %v23
  %v39 = vpack.c.bf16 %v26, %v25
  %v40 = vpack.c.bf16 %v28, %v27
  %v41 = vpack.c.bf16 %v30, %v29
  %v42 = vpack.c.bf16 %v32, %v31
  %v43 = vpack.c.bf16 %v34, %v33
  %v44 = vpack.c.bf16 %v36, %v35
  %v45 = vld [vmem:[%s1] sm:$0xf]
  %v46 = vld [vmem:[%s1 + $0x4] sm:$0xf]
  %v47 = vld [vmem:[%s1 + $0x8] sm:$0xf]
  %v48 = vld [vmem:[%s1 + $0xc] sm:$0xf]
  %v49 = vld [vmem:[%s1 + $0x10] sm:$0xf]
  %v50 = vld [vmem:[%s1 + $0x14] sm:$0xf]
  %v51 = vld [vmem:[%s1 + $0x18] sm:$0xf]
  %v52 = vld [vmem:[%s1 + $0x1c] sm:$0xf]
  %v53 = vld [vmem:[%s1 + $0x20] sm:$0xf]
  %v54 = vld [vmem:[%s1 + $0x24] sm:$0xf]
  %v55 = vld [vmem:[%s1 + $0x28] sm:$0xf]
  %v56 = vld [vmem:[%s1 + $0x2c] sm:$0xf]
  %v57 = vld [vmem:[%s1 + $0x30] sm:$0xf]
  %v58 = vld [vmem:[%s1 + $0x34] sm:$0xf]
  %v59 = vld [vmem:[%s1 + $0x38] sm:$0xf]
  %v60 = vld [vmem:[%s1 + $0x3c] sm:$0xf]
  %v61 = vld [vmem:[%s2] sm:$0x1]
  %v63 = vlaneseq
  %v64 = vshrl.u32 %v63, 7
  %v65 = vsub.s32 0, %v64
  %v66 = vrot.slane %v61, %v65
  %v84 = vunpack.c.l.b16 %v45
  %v85 = vunpack.c.l.b16 %v46
  %v86 = vunpack.c.l.b16 %v47
  %v87 = vunpack.c.l.b16 %v48
  %v88 = vunpack.c.l.b16 %v49
  %v89 = vunpack.c.l.b16 %v50
  %v90 = vunpack.c.l.b16 %v51
  %v91 = vunpack.c.l.b16 %v52
  %v92 = vunpack.c.l.b16 %v53
  %v93 = vunpack.c.l.b16 %v54
  %v94 = vunpack.c.l.b16 %v55
  %v95 = vunpack.c.l.b16 %v56
  %v96 = vunpack.c.l.b16 %v57
  %v97 = vunpack.c.l.b16 %v58
  %v98 = vunpack.c.l.b16 %v59
  %v99 = vunpack.c.l.b16 %v60
  %v100 = vpack.c.b16 %v85, %v84
  %v101 = vpack.c.b16 %v87, %v86
  %v102 = vpack.c.b16 %v89, %v88
  %v103 = vpack.c.b16 %v91, %v90
  %v104 = vpack.c.b16 %v93, %v92
  %v105 = vpack.c.b16 %v95, %v94
  %v106 = vpack.c.b16 %v97, %v96
  %v107 = vpack.c.b16 %v99, %v98
  %116 = vmatprep.subr.bf16.mxu0 0
  %117 = vmatpush1.bf16.msra.mxu0 %v107
  %118 = vmatprep.subr.bf16.mxu0 0
  %119 = vmatpush1.bf16.msra.mxu0 %v106
  %120 = vmatprep.subr.bf16.mxu0 0
  %121 = vmatpush1.bf16.msra.mxu0 %v105
  %122 = vmatprep.subr.bf16.mxu0 0
  %123 = vmatpush1.bf16.msra.mxu0 %v104
  %124 = vmatprep.subr.bf16.mxu0 0
  %125 = vmatpush1.bf16.msra.mxu0 %v103
  %126 = vmatprep.subr.bf16.mxu0 0
  %127 = vmatpush1.bf16.msra.mxu0 %v102
  %128 = vmatprep.subr.bf16.mxu0 0
  %129 = vmatpush1.bf16.msra.mxu0 %v101
  %130 = vmatprep.subr.bf16.mxu0 0
  %131 = vmatpush1.bf16.msra.mxu0 %v100
  %132 = vmatprep.subr.bf16.mxu0 0
  %133 = vmatpush2.bf16.msra.mxu0 0
  %134 = vmatprep.subr.bf16.mxu0 0
  %135 = vmatpush2.bf16.msra.mxu0 0
  %136 = vmatprep.subr.bf16.mxu0 0
  %137 = vmatpush2.bf16.msra.mxu0 0
  %138 = vmatprep.subr.bf16.mxu0 0
  %139 = vmatpush2.bf16.msra.mxu0 0
  %140 = vmatprep.subr.bf16.mxu0 0
  %141 = vmatpush2.bf16.msra.mxu0 0
  %142 = vmatprep.subr.bf16.mxu0 0
  %143 = vmatpush2.bf16.msra.mxu0 0
  %144 = vmatprep.subr.bf16.mxu0 0
  %145 = vmatpush2.bf16.msra.mxu0 0
  %146 = vmatprep.subr.bf16.mxu0 0
  %147 = vmatpush2.bf16.msra.mxu0 0
  %148 = vmatprep.mubr.bf16.mxu0 0
  %149 = vmatmul.mubr.bf16.gmra.mxu0 %v37
  %v150 = vpop.f32.mrf.mxu0
  %v151 = vadd.f32 %v66, %v150
  %v152 = vpop.f32.mrf.mxu0
  %v153 = vpop.f32.mrf.mxu0
  %v154 = vadd.f32 %v66, %v153
  %v155 = vpop.f32.mrf.mxu0
  %156 = vmatprep.mubr.bf16.mxu0 0
  %157 = vmatmul.mubr.bf16.gmra.mxu0 %v38
  %v158 = vpop.f32.mrf.mxu0
  %v159 = vadd.f32 %v66, %v158
  %v160 = vpop.f32.mrf.mxu0
  %v161 = vpop.f32.mrf.mxu0
  %v162 = vadd.f32 %v66, %v161
  %v163 = vpop.f32.mrf.mxu0
  %164 = vmatprep.mubr.bf16.mxu0 0
  %165 = vmatmul.mubr.bf16.gmra.mxu0 %v39
  %v166 = vpop.f32.mrf.mxu0
  %v167 = vadd.f32 %v66, %v166
  %v168 = vpop.f32.mrf.mxu0
  %v169 = vpop.f32.mrf.mxu0
  %v170 = vadd.f32 %v66, %v169
  %v171 = vpop.f32.mrf.mxu0
  %172 = vmatprep.mubr.bf16.mxu0 0
  %173 = vmatmul.mubr.bf16.gmra.mxu0 %v40
  %v174 = vpop.f32.mrf.mxu0
  %v175 = vadd.f32 %v66, %v174
  %v176 = vpop.f32.mrf.mxu0
  %v177 = vpop.f32.mrf.mxu0
  %v178 = vadd.f32 %v66, %v177
  %v179 = vpop.f32.mrf.mxu0
  %180 = vmatprep.mubr.bf16.mxu0 0
  %181 = vmatmul.mubr.bf16.gmra.mxu0 %v41
  %v182 = vpop.f32.mrf.mxu0
  %v183 = vadd.f32 %v66, %v182
  %v184 = vpop.f32.mrf.mxu0
  %v185 = vpop.f32.mrf.mxu0
  %v186 = vadd.f32 %v66, %v185
  %v187 = vpop.f32.mrf.mxu0
  %188 = vmatprep.mubr.bf16.mxu0 0
  %189 = vmatmul.mubr.bf16.gmra.mxu0 %v42
  %v190 = vpop.f32.mrf.mxu0
  %v191 = vadd.f32 %v66, %v190
  %v192 = vpop.f32.mrf.mxu0
  %v193 = vpop.f32.mrf.mxu0
  %v194 = vadd.f32 %v66, %v193
  %v195 = vpop.f32.mrf.mxu0
  %196 = vmatprep.mubr.bf16.mxu0 0
  %197 = vmatmul.mubr.bf16.gmra.mxu0 %v43
  %v198 = vpop.f32.mrf.mxu0
  %v199 = vadd.f32 %v66, %v198
  %v200 = vpop.f32.mrf.mxu0
  %v201 = vpop.f32.mrf.mxu0
  %v202 = vadd.f32 %v66, %v201
  %v203 = vpop.f32.mrf.mxu0
  %204 = vmatprep.mubr.bf16.mxu0 0
  %205 = vmatmul.mubr.bf16.gmra.mxu0 %v44
  %v206 = vpop.f32.mrf.mxu0
  %v207 = vadd.f32 %v66, %v206
  %v208 = vpop.f32.mrf.mxu0
  %v209 = vpop.f32.mrf.mxu0
  %v210 = vadd.f32 %v66, %v209
  %v211 = vpop.f32.mrf.mxu0
  %212 = vdwg.mxu0
  %v213 = vpack.c.bf16 %v154, %v151
  %v214 = vpack.c.bf16 %v162, %v159
  %v215 = vpack.c.bf16 %v170, %v167
  %v216 = vpack.c.bf16 %v178, %v175
  %v217 = vpack.c.bf16 %v186, %v183
  %v218 = vpack.c.bf16 %v194, %v191
  %v219 = vpack.c.bf16 %v202, %v199
  %v220 = vpack.c.bf16 %v210, %v207
  %v221 = vld [vmem:[%s3] sm:$0xf]
  %v222 = vld [vmem:[%s3 + $0x4] sm:$0xf]
  %v223 = vld [vmem:[%s3 + $0x8] sm:$0xf]
  %v224 = vld [vmem:[%s3 + $0xc] sm:$0xf]
  %v225 = vld [vmem:[%s3 + $0x10] sm:$0xf]
  %v226 = vld [vmem:[%s3 + $0x14] sm:$0xf]
  %v227 = vld [vmem:[%s3 + $0x18] sm:$0xf]
  %v228 = vld [vmem:[%s3 + $0x1c] sm:$0xf]
  %v229 = vld [vmem:[%s3 + $0x20] sm:$0xf]
  %v230 = vld [vmem:[%s3 + $0x24] sm:$0xf]
  %v231 = vld [vmem:[%s3 + $0x28] sm:$0xf]
  %v232 = vld [vmem:[%s3 + $0x2c] sm:$0xf]
  %v233 = vld [vmem:[%s3 + $0x30] sm:$0xf]
  %v234 = vld [vmem:[%s3 + $0x34] sm:$0xf]
  %v235 = vld [vmem:[%s3 + $0x38] sm:$0xf]
  %v236 = vld [vmem:[%s3 + $0x3c] sm:$0xf]
  %v237 = vld [vmem:[%s4] sm:$0x1]
  %v239 = vlaneseq
  %v240 = vshrl.u32 %v239, 7
  %v241 = vsub.s32 0, %v240
  %v242 = vrot.slane %v237, %v241
  %v260 = vunpack.c.l.b16 %v221
  %v261 = vunpack.c.l.b16 %v222
  %v262 = vunpack.c.l.b16 %v223
  %v263 = vunpack.c.l.b16 %v224
  %v264 = vunpack.c.l.b16 %v225
  %v265 = vunpack.c.l.b16 %v226
  %v266 = vunpack.c.l.b16 %v227
  %v267 = vunpack.c.l.b16 %v228
  %v268 = vunpack.c.l.b16 %v229
  %v269 = vunpack.c.l.b16 %v230
  %v270 = vunpack.c.l.b16 %v231
  %v271 = vunpack.c.l.b16 %v232
  %v272 = vunpack.c.l.b16 %v233
  %v273 = vunpack.c.l.b16 %v234
  %v274 = vunpack.c.l.b16 %v235
  %v275 = vunpack.c.l.b16 %v236
  %v276 = vpack.c.b16 %v261, %v260
  %v277 = vpack.c.b16 %v263, %v262
  %v278 = vpack.c.b16 %v265, %v264
  %v279 = vpack.c.b16 %v267, %v266
  %v280 = vpack.c.b16 %v269, %v268
  %v281 = vpack.c.b16 %v271, %v270
  %v282 = vpack.c.b16 %v273, %v272
  %v283 = vpack.c.b16 %v275, %v274
  %292 = vmatprep.subr.bf16.mxu0 0
  %293 = vmatpush1.bf16.msra.mxu0 %v283
  %294 = vmatprep.subr.bf16.mxu0 0
  %295 = vmatpush1.bf16.msra.mxu0 %v282
  %296 = vmatprep.subr.bf16.mxu0 0
  %297 = vmatpush1.bf16.msra.mxu0 %v281
  %298 = vmatprep.subr.bf16.mxu0 0
  %299 = vmatpush1.bf16.msra.mxu0 %v280
  %300 = vmatprep.subr.bf16.mxu0 0
  %301 = vmatpush1.bf16.msra.mxu0 %v279
  %302 = vmatprep.subr.bf16.mxu0 0
  %303 = vmatpush1.bf16.msra.mxu0 %v278
  %304 = vmatprep.subr.bf16.mxu0 0
  %305 = vmatpush1.bf16.msra.mxu0 %v277
  %306 = vmatprep.subr.bf16.mxu0 0
  %307 = vmatpush1.bf16.msra.mxu0 %v276
  %308 = vmatprep.subr.bf16.mxu0 0
  %309 = vmatpush2.bf16.msra.mxu0 0
  %310 = vmatprep.subr.bf16.mxu0 0
  %311 = vmatpush2.bf16.msra.mxu0 0
  %312 = vmatprep.subr.bf16.mxu0 0
  %313 = vmatpush2.bf16.msra.mxu0 0
  %314 = vmatprep.subr.bf16.mxu0 0
  %315 = vmatpush2.bf16.msra.mxu0 0
  %316 = vmatprep.subr.bf16.mxu0 0
  %317 = vmatpush2.bf16.msra.mxu0 0
  %318 = vmatprep.subr.bf16.mxu0 0
  %319 = vmatpush2.bf16.msra.mxu0 0
  %320 = vmatprep.subr.bf16.mxu0 0
  %321 = vmatpush2.bf16.msra.mxu0 0
  %322 = vmatprep.subr.bf16.mxu0 0
  %323 = vmatpush2.bf16.msra.mxu0 0
  %324 = vmatprep.mubr.bf16.mxu0 0
  %325 = vmatmul.mubr.bf16.gmra.mxu0 %v213
  %v326 = vpop.f32.mrf.mxu0
  %v327 = vadd.f32 %v242, %v326
  %v328 = vpop.f32.mrf.mxu0
  %v329 = vpop.f32.mrf.mxu0
  %v330 = vadd.f32 %v242, %v329
  %v331 = vpop.f32.mrf.mxu0
  %332 = vmatprep.mubr.bf16.mxu0 0
  %333 = vmatmul.mubr.bf16.gmra.mxu0 %v214
  %v334 = vpop.f32.mrf.mxu0
  %v335 = vadd.f32 %v242, %v334
  %v336 = vpop.f32.mrf.mxu0
  %v337 = vpop.f32.mrf.mxu0
  %v338 = vadd.f32 %v242, %v337
  %v339 = vpop.f32.mrf.mxu0
  %340 = vmatprep.mubr.bf16.mxu0 0
  %341 = vmatmul.mubr.bf16.gmra.mxu0 %v215
  %v342 = vpop.f32.mrf.mxu0
  %v343 = vadd.f32 %v242, %v342
  %v344 = vpop.f32.mrf.mxu0
  %v345 = vpop.f32.mrf.mxu0
  %v346 = vadd.f32 %v242, %v345
  %v347 = vpop.f32.mrf.mxu0
  %348 = vmatprep.mubr.bf16.mxu0 0
  %349 = vmatmul.mubr.bf16.gmra.mxu0 %v216
  %v350 = vpop.f32.mrf.mxu0
  %v351 = vadd.f32 %v242, %v350
  %v352 = vpop.f32.mrf.mxu0
  %v353 = vpop.f32.mrf.mxu0
  %v354 = vadd.f32 %v242, %v353
  %v355 = vpop.f32.mrf.mxu0
  %356 = vmatprep.mubr.bf16.mxu0 0
  %357 = vmatmul.mubr.bf16.gmra.mxu0 %v217
  %v358 = vpop.f32.mrf.mxu0
  %v359 = vadd.f32 %v242, %v358
  %v360 = vpop.f32.mrf.mxu0
  %v361 = vpop.f32.mrf.mxu0
  %v362 = vadd.f32 %v242, %v361
  %v363 = vpop.f32.mrf.mxu0
  %364 = vmatprep.mubr.bf16.mxu0 0
  %365 = vmatmul.mubr.bf16.gmra.mxu0 %v218
  %v366 = vpop.f32.mrf.mxu0
  %v367 = vadd.f32 %v242, %v366
  %v368 = vpop.f32.mrf.mxu0
  %v369 = vpop.f32.mrf.mxu0
  %v370 = vadd.f32 %v242, %v369
  %v371 = vpop.f32.mrf.mxu0
  %372 = vmatprep.mubr.bf16.mxu0 0
  %373 = vmatmul.mubr.bf16.gmra.mxu0 %v219
  %v374 = vpop.f32.mrf.mxu0
  %v375 = vadd.f32 %v242, %v374
  %v376 = vpop.f32.mrf.mxu0
  %v377 = vpop.f32.mrf.mxu0
  %v378 = vadd.f32 %v242, %v377
  %v379 = vpop.f32.mrf.mxu0
  %380 = vmatprep.mubr.bf16.mxu0 0
  %381 = vmatmul.mubr.bf16.gmra.mxu0 %v220
  %v382 = vpop.f32.mrf.mxu0
  %v383 = vadd.f32 %v242, %v382
  %v384 = vpop.f32.mrf.mxu0
  %v385 = vpop.f32.mrf.mxu0
  %v386 = vadd.f32 %v242, %v385
  %v387 = vpop.f32.mrf.mxu0
  %388 = vdwg.mxu0
  %389 = vst [vmem:[%s5] sm:$0xff] %v327
  %390 = vst [vmem:[%s5 + $0x8] sm:$0xff] %v330
  %391 = vst [vmem:[%s5 + $0x10] sm:$0xff] %v335
  %392 = vst [vmem:[%s5 + $0x18] sm:$0xff] %v338
  %393 = vst [vmem:[%s5 + $0x20] sm:$0xff] %v343
  %394 = vst [vmem:[%s5 + $0x28] sm:$0xff] %v346
  %395 = vst [vmem:[%s5 + $0x30] sm:$0xff] %v351
  %396 = vst [vmem:[%s5 + $0x38] sm:$0xff] %v354
  %397 = vst [vmem:[%s5 + $0x40] sm:$0xff] %v359
  %398 = vst [vmem:[%s5 + $0x48] sm:$0xff] %v362
  %399 = vst [vmem:[%s5 + $0x50] sm:$0xff] %v367
  %400 = vst [vmem:[%s5 + $0x58] sm:$0xff] %v370
  %401 = vst [vmem:[%s5 + $0x60] sm:$0xff] %v375
  %402 = vst [vmem:[%s5 + $0x68] sm:$0xff] %v378
  %403 = vst [vmem:[%s5 + $0x70] sm:$0xff] %v383
  %404 = vst [vmem:[%s5 + $0x78] sm:$0xff] %v386
  // Predicated region
  $region22: #{forward.1} parent=0 // pred_check
    _
  $region23: #{forward.1} parent=0 // pred_check_branch
    %406 = sbr.rel (0) target = $region25
  $region24: #{forward.1} parent=0 // pred_region
    _
  $region25: #{forward.1} parent=0 // pred_fallthru
    _
  // Predicated region
  $region26: #{forward.1} parent=0 // pred_check
    _
  $region27: #{forward.1} parent=0 // pred_check_branch
    %408 = sbr.rel (0) target = $region29
  $region28: #{forward.1} parent=0 // pred_region
    _
  $region29: #{forward.1} parent=0 // pred_fallthru
    _

</llo_original>
